<compile_context>
chip_gen: v7x
topology: tpu7x:2x2x1
jax: 0.10.0
libtpu: 0.0.40
codegen_flags: <defaults>
</compile_context>

<pallas_src>
import functools

import jax
import jax.numpy as jnp
from jax.experimental import pallas as pl
from jax.experimental.pallas import tpu as pltpu


def _ce_kernel(logits_ref, target_ref, out_ref, m_sc, l_sc, xt_sc,
               *, n_rows, n_cols, tile_n, tile_c):
    ri = pl.program_id(0)   # row-tile index ("parallel")
    ci = pl.program_id(1)   # class-tile index ("arbitrary", reduction)

    @pl.when(ci == 0)
    def _init():
        m_sc[...] = jnp.full_like(m_sc, -jnp.inf)
        l_sc[...] = jnp.zeros_like(l_sc)
        xt_sc[...] = jnp.zeros_like(xt_sc)

    # Upcast inside the kernel (bf16 stays bf16 on the wire; cast is cheap VPU
    # work hidden under DMA).
    x = logits_ref[...].astype(jnp.float32)            # (tile_n, tile_c)
    t = target_ref[...]                                # (tile_n, 1) int32

    # One iota per class tile; reused for the edge mask and the target pick,
    # then dead (keeps vreg pressure low).
    col = ci * tile_c + jax.lax.broadcasted_iota(jnp.int32, x.shape, 1)
    if n_cols % tile_c != 0:                           # static: only mask ragged C
        x = jnp.where(col < n_cols, x, -jnp.inf)

    # Online (flash-style) logsumexp update.
    m_prev = m_sc[...]
    m_new = jnp.maximum(m_prev, jnp.max(x, axis=-1, keepdims=True))
    p = jnp.exp(x - m_new)
    l_sc[...] = jnp.exp(m_prev - m_new) * l_sc[...] + jnp.sum(p, axis=-1, keepdims=True)
    m_sc[...] = m_new

    # Accumulate x[i, target[i]] when the target lands in this class tile.
    xt_sc[...] += jnp.sum(jnp.where(col == t, x, 0.0), axis=-1, keepdims=True)

    @pl.when(ci == pl.num_programs(1) - 1)
    def _finalize():
        per_row = m_sc[...] + jnp.log(l_sc[...]) - xt_sc[...]    # (tile_n, 1)
        if n_rows % tile_n != 0:                                 # static: ragged N only
            row = ri * tile_n + jax.lax.broadcasted_iota(jnp.int32, per_row.shape, 0)
            per_row = jnp.where(row < n_rows, per_row, 0.0)
        partial = jnp.sum(per_row)
        # Lane-dense (8,128) output block; wrapper reads element [0, 0].
        out_ref[...] = jnp.broadcast_to(partial, out_ref.shape).astype(jnp.float32)


def _choose_tiles(n, c, itemsize):
    """Largest double-buffered tiles that stay inside a VMEM budget safe for
    v5e/v6e (128 MiB) and v7x (64 MiB physical)."""
    tile_c = c if c <= 4096 else 4096                  # lane-aligned class tile
    budget = 24 * 1024 * 1024                          # bytes for 2x logits buffers
    max_rows = max(8, budget // (2 * tile_c * itemsize))
    tile_n = min(n, 1024, int(max_rows))
    if tile_n < n:
        tile_n = max(8, (tile_n // 8) * 8)             # sublane alignment
    return tile_n, tile_c


def cross_entropy_loss(logits: jax.Array, target: jax.Array,
                       *, tile_n: int | None = None, tile_c: int | None = None) -> jax.Array:
    """logits: (N, C) float (f32 or bf16); target: (N,) integer class indices.
    Returns scalar float32 mean NLL, matching nn.CrossEntropyLoss() defaults."""
    n, c = logits.shape
    itemsize = jnp.dtype(logits.dtype).itemsize

    auto_n, auto_c = _choose_tiles(n, c, itemsize)
    tile_n = auto_n if tile_n is None else tile_n
    tile_c = auto_c if tile_c is None else tile_c
    # Enforce TPU block constraints (multiple of (8,128) or equal to full dim).
    if tile_n < n and tile_n % 8 != 0:
        tile_n = max(8, (tile_n // 8) * 8)
    tile_n = min(tile_n, n)
    if tile_c < c and tile_c % 128 != 0:
        tile_c = max(128, (tile_c // 128) * 128)
    tile_c = min(tile_c, c)

    num_row_tiles = -(-n // tile_n)
    num_col_tiles = -(-c // tile_c)

    target_2d = target.astype(jnp.int32).reshape(n, 1)

    kernel = functools.partial(_ce_kernel, n_rows=n, n_cols=c,
                               tile_n=tile_n, tile_c=tile_c)

    # Explicit VMEM limit sized to the actual need, capped so it also fits
    # v7x's 64 MiB physical VMEM.
    vmem_need = (2 * tile_n * tile_c * itemsize        # double-buffered logits
                 + 2 * tile_n * 4                      # double-buffered targets
                 + 2 * 8 * 128 * 4                     # output blocks
                 + 3 * tile_n * 4)                     # m/l/xt scratch
    vmem_limit = int(min(48 * 1024 * 1024, max(32 * 1024 * 1024, vmem_need * 3 // 2)))

    out = pl.pallas_call(
        kernel,
        out_shape=jax.ShapeDtypeStruct((num_row_tiles * 8, 128), jnp.float32),
        grid_spec=pltpu.PrefetchScalarGridSpec(
            num_scalar_prefetch=0,
            grid=(num_row_tiles, num_col_tiles),
            in_specs=[
                pl.BlockSpec((tile_n, tile_c), lambda ri, ci: (ri, ci)),
                pl.BlockSpec((tile_n, 1), lambda ri, ci: (ri, 0)),
            ],
            out_specs=pl.BlockSpec((8, 128), lambda ri, ci: (ri, 0)),
            scratch_shapes=[
                pltpu.VMEM((tile_n, 1), jnp.float32),   # running max m
                pltpu.VMEM((tile_n, 1), jnp.float32),   # running sum l
                pltpu.VMEM((tile_n, 1), jnp.float32),   # target logit accumulator
            ],
        ),
        compiler_params=pltpu.CompilerParams(
            dimension_semantics=("parallel", "arbitrary"),
            vmem_limit_bytes=vmem_limit,
        ),
    )(logits, target_2d)

    # Final mean over the TRUE batch size (padded rows were masked in-kernel).
    partials = out.reshape(num_row_tiles, 8, 128)[:, 0, 0]
    return jnp.sum(partials) / jnp.float32(n)


def _reference_ce(logits, target):
    x = logits.astype(jnp.float32)
    lse = jax.nn.logsumexp(x, axis=-1)
    x_t = jnp.take_along_axis(x, target[:, None].astype(jnp.int32), axis=-1)[:, 0]
    return jnp.mean(lse - x_t)


if __name__ == "__main__":
    key = jax.random.PRNGKey(0)
    k1, k2, k3, k4, k5, k6 = jax.random.split(key, 6)

    # Case 1: small lane-aligned problem, single tile.
    N1, C1 = 8, 128
    logits1 = jax.random.normal(k1, (N1, C1), dtype=jnp.float32)
    target1 = jax.random.randint(k2, (N1,), 0, C1, dtype=jnp.int32)
    loss1 = cross_entropy_loss(logits1, target1)
    jax.block_until_ready(loss1)
    ref1 = _reference_ce(logits1, target1)
    assert jnp.allclose(loss1, ref1, atol=1e-5, rtol=1e-5), (loss1, ref1)

    # Case 2: ragged rows AND classes with forced small tiles -> 3x2 grid,
    # exercising the online-logsumexp class loop and both edge masks.
    N2, C2 = 20, 200
    logits2 = jax.random.normal(k3, (N2, C2), dtype=jnp.float32)
    target2 = jax.random.randint(k4, (N2,), 0, C2, dtype=jnp.int32)
    loss2 = cross_entropy_loss(logits2, target2, tile_n=8, tile_c=128)
    jax.block_until_ready(loss2)
    ref2 = _reference_ce(logits2, target2)
    assert jnp.allclose(loss2, ref2, atol=1e-5, rtol=1e-5), (loss2, ref2)

    # Case 3: bf16 logits streamed from HBM, upcast inside the kernel.
    N3, C3 = 16, 256
    logits3 = jax.random.normal(k5, (N3, C3), dtype=jnp.bfloat16)
    target3 = jax.random.randint(k6, (N3,), 0, C3, dtype=jnp.int32)
    loss3 = cross_entropy_loss(logits3, target3)
    jax.block_until_ready(loss3)
    ref3 = _reference_ce(logits3, target3)
    assert jnp.allclose(loss3, ref3, atol=1e-5, rtol=1e-5), (loss3, ref3)

    print("KERNEL_OK")
</pallas_src>

<mosaic_0001>
module attributes {stable_mosaic.version = 11 : i64} {
  func.func @_ce_kernel(%arg0: i32, %arg1: i32, %arg2: memref<8x128xf32, #tpu.memory_space<vmem>>, %arg3: memref<8x1xi32, #tpu.memory_space<vmem>>, %arg4: memref<8x128xf32, #tpu.memory_space<vmem>>, %arg5: memref<8x1xf32, #tpu.memory_space<vmem>>, %arg6: memref<8x1xf32, #tpu.memory_space<vmem>>, %arg7: memref<8x1xf32, #tpu.memory_space<vmem>>) attributes {dimension_semantics = [#tpu.dimension_semantics<parallel>, #tpu.dimension_semantics<arbitrary>], iteration_bounds = array<i64: 1, 1>, scalar_prefetch = 0 : i64, scratch_operands = 3 : i64, tpu.core_type = #tpu.core_type<tc>, window_params = [{transform_indices = @transform_0, window_bounds = array<i64: 8, 128>}, {transform_indices = @transform_1, window_bounds = array<i64: 8, 1>}, {transform_indices = @transform_2, window_bounds = array<i64: 8, 128>}]} {
    %c0_i32 = arith.constant 0 : i32
    %0 = arith.cmpi eq, %arg1, %c0_i32 : i32
    %1 = arith.extui %0 : i1 to i32
    %c0_i32_0 = arith.constant 0 : i32
    %2 = arith.cmpi ne, %1, %c0_i32_0 : i32
    scf.if %2 {
      %cst_21 = arith.constant 0xFF800000 : f32
      %37 = vector.broadcast %cst_21 : f32 to vector<8x1xf32>
      %c0_22 = arith.constant 0 : index
      %c0_23 = arith.constant 0 : index
      %38 = vector.load %arg5[%c0_22, %c0_23] : memref<8x1xf32, #tpu.memory_space<vmem>>, vector<8x1xf32>
      tpu.vector_store %arg5[%c0_22, %c0_23], %37 {strides = array<i32>} : memref<8x1xf32, #tpu.memory_space<vmem>>, vector<8x1xf32>,
      %cst_24 = arith.constant 0.000000e+00 : f32
      %39 = vector.broadcast %cst_24 : f32 to vector<8x1xf32>
      %c0_25 = arith.constant 0 : index
      %c0_26 = arith.constant 0 : index
      %40 = vector.load %arg6[%c0_25, %c0_26] : memref<8x1xf32, #tpu.memory_space<vmem>>, vector<8x1xf32>
      tpu.vector_store %arg6[%c0_25, %c0_26], %39 {strides = array<i32>} : memref<8x1xf32, #tpu.memory_space<vmem>>, vector<8x1xf32>,
      %cst_27 = arith.constant 0.000000e+00 : f32
      %41 = vector.broadcast %cst_27 : f32 to vector<8x1xf32>
      %c0_28 = arith.constant 0 : index
      %c0_29 = arith.constant 0 : index
      %42 = vector.load %arg7[%c0_28, %c0_29] : memref<8x1xf32, #tpu.memory_space<vmem>>, vector<8x1xf32>
      tpu.vector_store %arg7[%c0_28, %c0_29], %41 {strides = array<i32>} : memref<8x1xf32, #tpu.memory_space<vmem>>, vector<8x1xf32>,
    } else {
    }
    %c0 = arith.constant 0 : index
    %c0_1 = arith.constant 0 : index
    %3 = vector.load %arg2[%c0, %c0_1] : memref<8x128xf32, #tpu.memory_space<vmem>>, vector<8x128xf32>
    %c0_2 = arith.constant 0 : index
    %c0_3 = arith.constant 0 : index
    %4 = vector.load %arg3[%c0_2, %c0_3] : memref<8x1xi32, #tpu.memory_space<vmem>>, vector<8x1xi32>
    %c128_i32 = arith.constant 128 : i32
    %5 = arith.muli %arg1, %c128_i32 : i32
    %6 = tpu.iota {dimensions = array<i32: 1>} : vector<8x128xi32>
    %7 = vector.broadcast %5 : i32 to vector<8x128xi32>
    %8 = arith.addi %7, %6 : vector<8x128xi32>
    %c0_4 = arith.constant 0 : index
    %c0_5 = arith.constant 0 : index
    %9 = vector.load %arg5[%c0_4, %c0_5] : memref<8x1xf32, #tpu.memory_space<vmem>>, vector<8x1xf32>
    %cst = arith.constant dense<0xFF800000> : vector<8xf32>
    %10 = vector.multi_reduction <maximumf>, %3, %cst [1] : vector<8x128xf32> to vector<8xf32>
    %11 = vector.shape_cast %10 : vector<8xf32> to vector<8x1xf32>
    %12 = arith.maximumf %9, %11 : vector<8x1xf32>
    %13 = vector.broadcast %12 : vector<8x1xf32> to vector<8x128xf32>
    %14 = arith.subf %3, %13 : vector<8x128xf32>
    %15 = math.exp %14 : vector<8x128xf32>
    %16 = arith.subf %9, %12 : vector<8x1xf32>
    %17 = math.exp %16 : vector<8x1xf32>
    %c0_6 = arith.constant 0 : index
    %c0_7 = arith.constant 0 : index
    %18 = vector.load %arg6[%c0_6, %c0_7] : memref<8x1xf32, #tpu.memory_space<vmem>>, vector<8x1xf32>
    %19 = arith.mulf %17, %18 : vector<8x1xf32>
    %cst_8 = arith.constant dense<0.000000e+00> : vector<8xf32>
    %20 = vector.multi_reduction <add>, %15, %cst_8 [1] : vector<8x128xf32> to vector<8xf32>
    %21 = vector.shape_cast %20 : vector<8xf32> to vector<8x1xf32>
    %22 = arith.addf %19, %21 : vector<8x1xf32>
    %c0_9 = arith.constant 0 : index
    %c0_10 = arith.constant 0 : index
    %23 = vector.load %arg6[%c0_9, %c0_10] : memref<8x1xf32, #tpu.memory_space<vmem>>, vector<8x1xf32>
    tpu.vector_store %arg6[%c0_9, %c0_10], %22 {strides = array<i32>} : memref<8x1xf32, #tpu.memory_space<vmem>>, vector<8x1xf32>,
    %c0_11 = arith.constant 0 : index
    %c0_12 = arith.constant 0 : index
    %24 = vector.load %arg5[%c0_11, %c0_12] : memref<8x1xf32, #tpu.memory_space<vmem>>, vector<8x1xf32>
    tpu.vector_store %arg5[%c0_11, %c0_12], %12 {strides = array<i32>} : memref<8x1xf32, #tpu.memory_space<vmem>>, vector<8x1xf32>,
    %c0_13 = arith.constant 0 : index
    %c0_14 = arith.constant 0 : index
    %25 = vector.load %arg7[%c0_13, %c0_14] : memref<8x1xf32, #tpu.memory_space<vmem>>, vector<8x1xf32>
    %26 = vector.broadcast %4 : vector<8x1xi32> to vector<8x128xi32>
    %27 = arith.cmpi eq, %8, %26 : vector<8x128xi32>
    %cst_15 = arith.constant 0.000000e+00 : f32
    %28 = vector.broadcast %cst_15 : f32 to vector<8x128xf32>
    %29 = arith.select %27, %3, %28 : vector<8x128xi1>, vector<8x128xf32>
    %cst_16 = arith.constant dense<0.000000e+00> : vector<8xf32>
    %30 = vector.multi_reduction <add>, %29, %cst_16 [1] : vector<8x128xf32> to vector<8xf32>
    %31 = vector.shape_cast %30 : vector<8xf32> to vector<8x1xf32>
    %32 = arith.addf %25, %31 : vector<8x1xf32>
    %c0_17 = arith.constant 0 : index
    %c0_18 = arith.constant 0 : index
    %33 = vector.load %arg7[%c0_17, %c0_18] : memref<8x1xf32, #tpu.memory_space<vmem>>, vector<8x1xf32>
    tpu.vector_store %arg7[%c0_17, %c0_18], %32 {strides = array<i32>} : memref<8x1xf32, #tpu.memory_space<vmem>>, vector<8x1xf32>,
    %c0_i32_19 = arith.constant 0 : i32
    %34 = arith.cmpi eq, %arg1, %c0_i32_19 : i32
    %35 = arith.extui %34 : i1 to i32
    %c0_i32_20 = arith.constant 0 : i32
    %36 = arith.cmpi ne, %35, %c0_i32_20 : i32
    scf.if %36 {
      %c0_21 = arith.constant 0 : index
      %c0_22 = arith.constant 0 : index
      %37 = vector.load %arg5[%c0_21, %c0_22] : memref<8x1xf32, #tpu.memory_space<vmem>>, vector<8x1xf32>
      %c0_23 = arith.constant 0 : index
      %c0_24 = arith.constant 0 : index
      %38 = vector.load %arg6[%c0_23, %c0_24] : memref<8x1xf32, #tpu.memory_space<vmem>>, vector<8x1xf32>
      %39 = math.log %38 : vector<8x1xf32>
      %40 = arith.addf %37, %39 : vector<8x1xf32>
      %c0_25 = arith.constant 0 : index
      %c0_26 = arith.constant 0 : index
      %41 = vector.load %arg7[%c0_25, %c0_26] : memref<8x1xf32, #tpu.memory_space<vmem>>, vector<8x1xf32>
      %42 = arith.subf %40, %41 : vector<8x1xf32>
      %43 = vector.shape_cast %42 : vector<8x1xf32> to vector<1x8x1xf32>
      %cst_27 = arith.constant dense<0.000000e+00> : vector<1xf32>
      %44 = vector.multi_reduction <add>, %43, %cst_27 [1, 2] : vector<1x8x1xf32> to vector<1xf32>
      %45 = vector.shape_cast %44 : vector<1xf32> to vector<1x1x1xf32>
      %46 = vector.extract %45[0, 0, 0] : f32 from vector<1x1x1xf32>
      %47 = vector.broadcast %46 : f32 to vector<8x128xf32>
      %c0_28 = arith.constant 0 : index
      %c0_29 = arith.constant 0 : index
      %48 = vector.load %arg4[%c0_28, %c0_29] : memref<8x128xf32, #tpu.memory_space<vmem>>, vector<8x128xf32>
      tpu.vector_store %arg4[%c0_28, %c0_29], %47 {strides = array<i32>} : memref<8x128xf32, #tpu.memory_space<vmem>>, vector<8x128xf32>,
    } else {
    }
    return
  }
  func.func @transform_0(%arg0: i32, %arg1: i32) -> (i32, i32) {
    %c0_i32 = arith.constant 0 : i32
    return %arg0, %arg1 : i32, i32
  }
  func.func @transform_1(%arg0: i32, %arg1: i32) -> (i32, i32) {
    %c0_i32 = arith.constant 0 : i32
    %c0_i32_0 = arith.constant 0 : i32
    return %arg0, %c0_i32 : i32, i32
  }
  func.func @transform_2(%arg0: i32, %arg1: i32) -> (i32, i32) {
    %c0_i32 = arith.constant 0 : i32
    %c0_i32_0 = arith.constant 0 : i32
    return %arg0, %c0_i32 : i32, i32
  }
}

</mosaic_0001>

<llo_original>
// kernel: tpu_custom_call.1
$region0: #{tpu_custom_call.1}
  #allocation0 [shape = 'u32[]', space=smem, size = 0x4, offset = 0x4, fixed_abs, tag = 'smem constant byte address 0x4 - core index']
  #allocation1 [shape = 'u32[144,128]{1,0:T(1,128)}', space=vmem, size = 0x12000, scoped, tag = 'internal scratch']
  #allocation2 [shape = 'f32[8,1]{1,0:T(8,128)}', space=vmem, size = 0x1000, scoped, tag = 'scratch operand']
  #allocation3 [shape = 'f32[8,1]{1,0:T(8,128)}', space=vmem, size = 0x1000, scoped, tag = 'scratch operand']
  #allocation4 [shape = 'f32[8,1]{1,0:T(8,128)}', space=vmem, size = 0x1000, scoped, tag = 'scratch operand']
  %s0 = inlined_call_operand.vmem [shape: f32[8,128], index: 0, kind: input, shape index: {}]
  %s1 = inlined_call_operand.vmem [shape: s32[8,1], index: 1, kind: input, shape index: {}]
  %s2 = inlined_call_operand.hbm [shape: f32[8,128], index: 2, kind: output, shape index: {}]
  %s3 = sld [smem:[#allocation0]]
  $region26: #{tpu_custom_call.1} parent=0
    _
  %s5 = ssub.s32 1, %s3
  %s6 = scalar_select 0, %s5, %s3
  $region1: #{tpu_custom_call.1} parent=0
    #allocation5 [shape = 'u8[4096]{0}', space=vmem, size = 0x1000, scoped, tag = 'output window, operand 0, single buffered']
    #allocation6 [shape = 's32[1]{0}', space=sflag, size = 0x4, scoped, tag = 'scoped memory for tpu_custom_call.1']
    %7 = vsyncpa [#allocation6], 0
    // Predicated region
    $region2: #{tpu_custom_call.1} parent=1 // pred_check
      _
    $region3: #{tpu_custom_call.1} parent=1 // pred_check_branch
      %9 = sbr.rel (0) target = $region5
    $region4: #{tpu_custom_call.1} parent=1 // pred_region
      _
    $region5: #{tpu_custom_call.1} parent=1 // pred_fallthru
      _
    // Predicated region
    $region6: #{tpu_custom_call.1} parent=1 // pred_check
      _
    $region7: #{tpu_custom_call.1} parent=1 // pred_check_branch
      %11 = sbr.rel (0) target = $region9
    $region8: #{tpu_custom_call.1} parent=1 // pred_region
      _
    $region9: #{tpu_custom_call.1} parent=1 // pred_fallthru
      _
    %p12 = scmp.eq.s32.totalorder 0, 0
    // Predicated region
    $region10: #{tpu_custom_call.1} parent=1 // pred_check
      %p13 = pneg %p12
    $region11: #{tpu_custom_call.1} parent=1 // pred_check_branch
      %15 = sbr.rel (%p13) target = $region13
    $region12: #{tpu_custom_call.1} parent=1 // pred_region
      %vm16 = vcmask 7168
      %17 = vst.msk [vmem:[#allocation2] sm:$0xff] %vm16, -inf
      %18 = vst.msk [vmem:[#allocation3] sm:$0xff] %vm16, 0.0
      %19 = vst.msk [vmem:[#allocation4] sm:$0xff] %vm16, 0.0
    $region13: #{tpu_custom_call.1} parent=1 // pred_fallthru
      _
    %v20 = vld [vmem:[%s0] sm:$0xff]
    %v21 = vld [vmem:[%s1] sm:$0xff]
    %s22 = smul.u32 0, 128
    %v23 = vlaneseq
    %v24 = vand.u32 %v23, 127
    %v25 = vstv %s22
    %v26 = vadd.s32 %v25, %v24
    %v27 = vld [vmem:[#allocation2] sm:$0xff]
    %28 = vmax.xlane.f32.xlu0 %v20
    %v29 = vpop.xlane.xlu0 %28
    %v30 = vmax.f32 %v27, %v29
    %32 = vset.pattern.permute.xlu0 0
    %33 = vperm.xlu0 %32, %v30
    %v34 = vpop.permute.xlu0 %33
    %v36 = vsub.f32 %v20, %v34
    %v37 = vmul.f32 %v36, 1.442695
    %v38 = vpow.pop %v37
    %v39 = vsub.f32 %v27, %v30
    %v40 = vmul.f32 %v39, 1.442695
    %v41 = vpow.pop %v40
    %v42 = vld [vmem:[#allocation3] sm:$0xff]
    %v43 = vmul.f32 %v41, %v42
    %44 = vadd.xlane.f32.xlu0 %v38
    %v45 = vpop.xlane.xlu0 %44
    %v46 = vadd.f32 %v43, %v45
    %vm47 = vcmask 7168
    %48 = vst.msk [vmem:[#allocation3] sm:$0xff] %vm47, %v46
    %49 = vst.msk [vmem:[#allocation2] sm:$0xff] %vm47, %v30
    %v50 = vld [vmem:[#allocation4] sm:$0xff]
    %51 = vset.pattern.permute.xlu0 0
    %52 = vperm.xlu0 %51, %v21
    %v53 = vpop.permute.xlu0 %52
    %vm54 = vcmp.eq.s32.totalorder %v26, %v53
    %v55 = vsel %vm54, %v20, 0.0
    %56 = vadd.xlane.f32.xlu0 %v55
    %v57 = vpop.xlane.xlu0 %56
    %v58 = vadd.f32 %v50, %v57
    %59 = vst.msk [vmem:[#allocation4] sm:$0xff] %vm47, %v58
    // Predicated region
    $region14: #{tpu_custom_call.1} parent=1 // pred_check
      %p60 = pneg %p12
    $region15: #{tpu_custom_call.1} parent=1 // pred_check_branch
      %62 = sbr.rel (%p60) target = $region17
    $region16: #{tpu_custom_call.1} parent=1 // pred_region
      %v63 = vld [vmem:[#allocation2] sm:$0xff]
      %v64 = vld [vmem:[#allocation3] sm:$0xff]
      %v65 = vlog2.pop %v64
      %v66 = vmul.f32 %v65, 0.6931472
      %v67 = vadd.f32 %v63, %v66
      %v68 = vld [vmem:[#allocation4] sm:$0xff]
      %v69 = vsub.f32 %v67, %v68
      %v70 = vsel %vm47, %v69, 0.0
      %71 = vadd.xlane.f32.xlu0 %v70
      %v72 = vpop.xlane.xlu0 %71
      %v73 = vrot.slane %v72, 4
      %v74 = vadd.f32 %v72, %v73
      %v75 = vrot.slane %v74, 2
      %v76 = vadd.f32 %v74, %v75
      %v77 = vrot.slane %v76, 1
      %v78 = vadd.f32 %v76, %v77
      %s79 = vtos %v78
      %v80 = vstv %s79
      %81 = vst [vmem:[#allocation5] sm:$0xff] %v80
    $region17: #{tpu_custom_call.1} parent=1 // pred_fallthru
      _
    // Predicated region
    $region18: #{tpu_custom_call.1} parent=1 // pred_check
      _
    $region19: #{tpu_custom_call.1} parent=1 // pred_check_branch
      %83 = sbr.rel (0) target = $region21
    $region20: #{tpu_custom_call.1} parent=1 // pred_region
      %s85 = ssub.s32 128, 128
      %86 = vsyncadd [#allocation6], %s85
      %s88 = sshll.u32 [#allocation5], 4
      %s89 = int_to_ptr.vmem [resolvable:$true] %s88
      %91 = dma.vmem_to_hbm [thread:$0]  %s89, 128, %s2, [#allocation6]
    $region21: #{tpu_custom_call.1} parent=1 // pred_fallthru
      _
    // Predicated region
    $region22: #{tpu_custom_call.1} parent=1 // pred_check
      _
    $region23: #{tpu_custom_call.1} parent=1 // pred_check_branch
      %93 = sbr.rel (0) target = $region25
    $region24: #{tpu_custom_call.1} parent=1 // pred_region
      %94 = dma.done [#allocation6], 128
    $region25: #{tpu_custom_call.1} parent=1 // pred_fallthru
      _
    %95 = vsyncpa [#allocation6], 1

</llo_original>
